<compile_context>
chip_gen: v7x
topology: tpu7x:2x2x1
jax: 0.10.0
libtpu: 0.0.40
codegen_flags: <defaults>
</compile_context>

<pallas_src>
import functools

import jax
import jax.numpy as jnp
from jax.experimental import pallas as pl
from jax.experimental.pallas import tpu as pltpu

SIDE = 64          # int(sqrt(4096)) spatial side after the rearrange
P = SIDE * SIDE    # 4096 flattened positions (lane axis)


# -----------------------------------------------------------------------------
# Tiny probe: does pltpu.roll follow jnp.roll semantics (result[p] = x[p-shift])?
# Resolves the halo-shift sign robustly before building the fused comb kernel.
# -----------------------------------------------------------------------------
def _roll_matches_jnp():
    def kern(x_ref, o_ref):
        o_ref[...] = pltpu.roll(x_ref[...], shift=1, axis=1)

    x = jnp.broadcast_to(jnp.arange(128, dtype=jnp.float32)[None, :], (8, 128))
    y = pl.pallas_call(kern, out_shape=jax.ShapeDtypeStruct((8, 128), jnp.float32))(x)
    return bool(jnp.array_equal(y, jnp.roll(x, 1, axis=1)))


# -----------------------------------------------------------------------------
# Kernel 1: fused Linear + folded BatchNorm1d:  o = (x @ W) * scale + shift.
# Runs once on the concatenated (2B, 2048) batch; bf16 matmul, f32 accumulation.
# -----------------------------------------------------------------------------
def _backbone_kernel(x_ref, w_ref, scale_ref, shift_ref, o_ref):
    y = jnp.dot(x_ref[...], w_ref[...], preferred_element_type=jnp.float32)
    o_ref[...] = y * scale_ref[...] + shift_ref[...]


def backbone_linear_bn(x, w, scale, shift, *, tn=1024):
    M, K = x.shape
    Kw, N = w.shape
    assert K == Kw and N % tn == 0
    return pl.pallas_call(
        _backbone_kernel,
        out_shape=jax.ShapeDtypeStruct((M, N), jnp.float32),
        grid=(N // tn,),
        in_specs=[
            pl.BlockSpec((M, K), lambda j: (0, 0)),      # activations stay resident
            pl.BlockSpec((K, tn), lambda j: (0, j)),     # bf16 weight stream
            pl.BlockSpec((1, tn), lambda j: (0, j)),
            pl.BlockSpec((1, tn), lambda j: (0, j)),
        ],
        out_specs=pl.BlockSpec((M, tn), lambda j: (0, j)),
        compiler_params=pltpu.CompilerParams(dimension_semantics=("parallel",)),
    )(x, w, scale, shift)


# -----------------------------------------------------------------------------
# Kernel 2: the whole comb stack + classifier, fused per image (grid=(B,)).
# -----------------------------------------------------------------------------
def _make_comb_kernel(roll_like_jnp):
    def kernel(x1_ref, x2_ref,
               c1w0_ref, c1w1_ref, c1s_ref, c1t_ref,
               c2w_ref, c2s_ref, c2t_ref,
               c3w_ref, c3s_ref, c3t_ref,
               c4w_ref, c4s_ref, c4t_ref,
               g_ref, m_ref, o_ref, k_ref):

        def tap(x, kh, kw):
            # piece[p] = x[p + off] for in-image taps, 0 for zero padding.
            off = (kh - 1) * SIDE + (kw - 1)
            if off == 0:
                return x
            shift = ((-off) if roll_like_jnp else off) % P
            rolled = pltpu.roll(x, shift=shift, axis=1)
            mask = m_ref[pl.ds(kh * 3 + kw, 1), :]          # (1, P) bf16 constant
            return rolled * mask

        def conv3x3_bn_relu(x, w_ref, scale, shift):
            # x: (Cin, P) bf16; w_ref: (3, Cout, 3*Cin) bf16; scale/shift: (Cout,1)
            cin = x.shape[0]
            acc = None
            for kh in range(3):
                for kw in range(3):
                    k_ref[pl.ds(kw * cin, cin), :] = tap(x, kh, kw)
                d = jnp.dot(w_ref[kh], k_ref[pl.ds(0, 3 * cin), :],
                            preferred_element_type=jnp.float32)   # (Cout, P)
                acc = d if acc is None else acc + d               # chained (MRB-friendly)
            return jnp.maximum(acc * scale + shift, 0.0)          # f32

        a = x1_ref[0]                                   # (1, P) f32
        b = x2_ref[0]                                   # (1, P) f32

        # comb[0]: Conv2d(2->128, k=1) + BN + ReLU -- pure VPU epilogue.
        y1 = c1w0_ref[...] * a + c1w1_ref[...] * b       # (128,1)*(1,P) -> (128,P)
        y1 = jnp.maximum(y1 * c1s_ref[...] + c1t_ref[...], 0.0)
        a1 = y1.astype(jnp.bfloat16)

        # 3x3 conv + BN + ReLU blocks (activations stay on-chip, bf16 between dots).
        a2 = conv3x3_bn_relu(a1, c2w_ref, c2s_ref[...], c2t_ref[...]).astype(jnp.bfloat16)
        a3 = conv3x3_bn_relu(a2, c3w_ref, c3s_ref[...], c3t_ref[...]).astype(jnp.bfloat16)
        a4 = conv3x3_bn_relu(a3, c4w_ref, c4s_ref[...], c4t_ref[...])   # (64, P) f32

        # comb[-1] Conv2d(64->1, k=3) + flatten + cls Linear(4096->1): both linear,
        # exactly folded into the precomputed field G -> single multiply+reduce.
        o_ref[...] = jnp.sum(a4 * g_ref[...]).reshape(1, 1, 1)

    return kernel


def comb_forward(x1, x2, p, roll_like_jnp):
    B = x1.shape[0]
    x1r = x1.reshape(B, 1, P)
    x2r = x2.reshape(B, 1, P)
    c2w, c2s, c2t = p["c2"]
    c3w, c3s, c3t = p["c3"]
    c4w, c4s, c4t = p["c4"]

    def full(*shape):
        return pl.BlockSpec(shape, lambda b, _s=shape: (0,) * len(_s))

    out = pl.pallas_call(
        _make_comb_kernel(roll_like_jnp),
        out_shape=jax.ShapeDtypeStruct((B, 1, 1), jnp.float32),
        grid=(B,),
        in_specs=[
            pl.BlockSpec((1, 1, P), lambda b: (b, 0, 0)),   # x1 row of this image
            pl.BlockSpec((1, 1, P), lambda b: (b, 0, 0)),   # x2 row of this image
            full(128, 1), full(128, 1), full(128, 1), full(128, 1),          # c1
            full(3, 256, 3 * 128), full(256, 1), full(256, 1),               # c2
            full(3, 128, 3 * 256), full(128, 1), full(128, 1),               # c3
            full(3, 64, 3 * 128), full(64, 1), full(64, 1),                  # c4
            full(64, P),                                                     # G
            full(9, P),                                                      # edge masks
        ],
        out_specs=pl.BlockSpec((1, 1, 1), lambda b: (b, 0, 0)),
        scratch_shapes=[pltpu.VMEM((3 * 256, P), jnp.bfloat16)],   # shared K-slab (6 MiB)
        compiler_params=pltpu.CompilerParams(
            dimension_semantics=("parallel",),        # images across v7x cores
            vmem_limit_bytes=48 * 1024 * 1024),       # ~25 MiB need + headroom (< v7x 64 MiB)
    )(x1r, x2r,
      p["c1_w0"], p["c1_w1"], p["c1_scale"], p["c1_shift"],
      c2w, c2s, c2t, c3w, c3s, c3t, c4w, c4s, c4t,
      p["G"], p["masks"])
    return out.reshape(B, 1)


# -----------------------------------------------------------------------------
# Deterministic synthetic parameters (shapes follow the PyTorch module),
# stored in kernel-friendly layouts.
# -----------------------------------------------------------------------------
def _fold_bn(key, cout, bias, eps=1e-5):
    kg, kb, km, kv = jax.random.split(key, 4)
    gamma = 1.0 + 0.1 * jax.random.normal(kg, (cout,), jnp.float32)
    beta = 0.1 * jax.random.normal(kb, (cout,), jnp.float32)
    mean = 0.1 * jax.random.normal(km, (cout,), jnp.float32)
    var = 0.5 + jnp.abs(jax.random.normal(kv, (cout,), jnp.float32))
    s = gamma / jnp.sqrt(var + eps)
    return s, (bias - mean) * s + beta


def _edge_masks():
    # Multiplicative masks for the 8 non-center 3x3 taps (zero padding), bf16.
    pos = jnp.arange(P, dtype=jnp.int32)
    row, col = pos // SIDE, pos % SIDE
    rows = []
    for kh in range(3):
        for kw in range(3):
            dy, dx = kh - 1, kw - 1
            valid = ((row + dy >= 0) & (row + dy < SIDE) &
                     (col + dx >= 0) & (col + dx < SIDE))
            rows.append(valid.astype(jnp.bfloat16))
    return jnp.stack(rows)            # (9, P); row 4 (center) unused


def init_params(key):
    ks = jax.random.split(key, 16)
    p = {}

    # backbone: Linear(2048 -> 4096) + BatchNorm1d(4096), folded to scale/shift.
    wb = 0.02 * jax.random.normal(ks[0], (2048, 4096), jnp.float32)
    bb = 0.02 * jax.random.normal(ks[1], (4096,), jnp.float32)
    s, t = _fold_bn(ks[2], 4096, bb)
    p["bb_w"] = wb.astype(jnp.bfloat16)
    p["bb_scale"] = s.reshape(1, 4096)
    p["bb_shift"] = t.reshape(1, 4096)

    # comb[0]: Conv2d(2->128, k=1) + BN(128) + ReLU (VPU epilogue).
    w1 = jax.random.normal(ks[3], (128, 2), jnp.float32) * (2.0 ** -0.5)
    b1 = 0.02 * jax.random.normal(ks[4], (128,), jnp.float32)
    s, t = _fold_bn(ks[5], 128, b1)
    p["c1_w0"] = w1[:, 0:1]
    p["c1_w1"] = w1[:, 1:2]
    p["c1_scale"] = s.reshape(128, 1)
    p["c1_shift"] = t.reshape(128, 1)

    # comb 3x3 convs (+BN+ReLU): 128->256, 256->128, 128->64.  OIHW weights are
    # repacked to (kh, cout, kw*Cin + cin), matching the in-kernel K-slab order.
    conv_defs = [("c2", 128, 256), ("c3", 256, 128), ("c4", 128, 64)]
    for i, (name, cin, cout) in enumerate(conv_defs):
        kw_, kb_, kbn = jax.random.split(ks[6 + i], 3)
        w = jax.random.normal(kw_, (cout, cin, 3, 3), jnp.float32) * ((9.0 * cin) ** -0.5)
        b = 0.02 * jax.random.normal(kb_, (cout,), jnp.float32)
        s, t = _fold_bn(kbn, cout, b)
        wk = jnp.transpose(w, (2, 0, 3, 1)).reshape(3, cout, 3 * cin)
        p[name] = (wk.astype(jnp.bfloat16), s.reshape(cout, 1), t.reshape(cout, 1))

    # comb[-1]: Conv2d(64->1, k=3, pad=1, bias, no BN) followed by flatten and
    # cls Linear(4096->1).  Both are linear, so they fold exactly into
    #   fc = sum_{ci,p} a4[ci,p] * G[ci,p] + (clsb + b5*sum(clsw)).
    w5 = jax.random.normal(ks[9], (1, 64, 3, 3), jnp.float32) * ((9.0 * 64.0) ** -0.5)
    b5 = 0.02 * jax.random.normal(ks[10], (), jnp.float32)
    clsw = 0.02 * jax.random.normal(ks[11], (1, P), jnp.float32)
    clsb = 0.02 * jax.random.normal(ks[12], (), jnp.float32)
    cls2d = clsw.reshape(SIDE, SIDE)
    cls_pad = jnp.pad(cls2d, 1)
    g = jnp.zeros((64, SIDE, SIDE), jnp.float32)
    for kh in range(3):
        for kw in range(3):
            dy, dx = kh - 1, kw - 1
            shifted = cls_pad[1 - dy:1 - dy + SIDE, 1 - dx:1 - dx + SIDE]
            g = g + w5[0, :, kh, kw][:, None, None] * shifted[None]
    p["G"] = g.reshape(64, P)
    p["cls_const"] = clsb + b5 * jnp.sum(clsw)
    p["masks"] = _edge_masks()
    return p


# -----------------------------------------------------------------------------
# Forward pass (glue in plain JAX, hot paths in the two Pallas kernels).
# -----------------------------------------------------------------------------
def visual_siamese_forward(x1_feat, x2_feat, params, roll_like_jnp=True):
    B = x1_feat.shape[0]
    # img_feature(): ResNet features -> Linear + BatchNorm1d; one bf16 weight
    # stream shared by both images via a single (2B, 2048) batch.
    feats = jnp.concatenate([x1_feat, x2_feat], axis=0).astype(jnp.bfloat16)
    y = backbone_linear_bn(feats, params["bb_w"], params["bb_scale"], params["bb_shift"])
    x1, x2 = y[:B], y[B:]

    # Fused comb stack + folded conv5/cls classifier; only the per-image scalar
    # leaves VMEM.
    fc = comb_forward(x1, x2, params, roll_like_jnp) + params["cls_const"]
    return x1, x2, fc


if __name__ == "__main__":
    key = jax.random.PRNGKey(0)
    k1, k2, kp = jax.random.split(key, 3)
    B = 2
    # Flattened ResNet-50 pooled features (the module's img_feature input after
    # the backbone); feature width 2048 is fixed by Linear(in_features=2048).
    x1_feat = jax.random.normal(k1, (B, 2048), jnp.float32)
    x2_feat = jax.random.normal(k2, (B, 2048), jnp.float32)
    params = init_params(kp)

    roll_like_jnp = _roll_matches_jnp()   # resolve XLU rotate direction once
    fwd = jax.jit(functools.partial(visual_siamese_forward,
                                    roll_like_jnp=roll_like_jnp))
    x1, x2, fc = fwd(x1_feat, x2_feat, params)
    jax.block_until_ready((x1, x2, fc))

    assert x1.shape == (B, 4096) and x1.dtype == jnp.float32
    assert x2.shape == (B, 4096) and x2.dtype == jnp.float32
    assert fc.shape == (B, 1) and fc.dtype == jnp.float32
    assert bool(jnp.all(jnp.isfinite(x1)))
    assert bool(jnp.all(jnp.isfinite(fc)))
    print("KERNEL_OK")
</pallas_src>

<mosaic_0001>
module attributes {stable_mosaic.version = 11 : i64} {
  func.func @kern(%arg0: memref<8x128xf32, #tpu.memory_space<vmem>>, %arg1: memref<8x128xf32, #tpu.memory_space<vmem>>) attributes {dimension_semantics = [], scalar_prefetch = 0 : i64, scratch_operands = 0 : i64, tpu.core_type = #tpu.core_type<tc>} {
    %c0 = arith.constant 0 : index
    %c0_0 = arith.constant 0 : index
    %0 = vector.load %arg0[%c0, %c0_0] : memref<8x128xf32, #tpu.memory_space<vmem>>, vector<8x128xf32>
    %c1_i32 = arith.constant 1 : i32
    %1 = tpu.dynamic_rotate %0 by %c1_i32 dim 1 : vector<8x128xf32>, i32 -> vector<8x128xf32>
    %c0_1 = arith.constant 0 : index
    %c0_2 = arith.constant 0 : index
    %2 = vector.load %arg1[%c0_1, %c0_2] : memref<8x128xf32, #tpu.memory_space<vmem>>, vector<8x128xf32>
    tpu.vector_store %arg1[%c0_1, %c0_2], %1 {strides = array<i32>} : memref<8x128xf32, #tpu.memory_space<vmem>>, vector<8x128xf32>,
    return
  }
}

</mosaic_0001>

<llo_original>
// kernel: tpu_custom_call.1
$region0: #{tpu_custom_call.1}
  #allocation0 [shape = 'u32[]', space=smem, size = 0x4, offset = 0x4, fixed_abs, tag = 'smem constant byte address 0x4 - core index']
  #allocation1 [shape = 'u32[144,128]{1,0:T(1,128)}', space=vmem, size = 0x12000, scoped, tag = 'internal scratch']
  %s0 = inlined_call_operand.hbm [shape: f32[8,128], index: 0, kind: input, shape index: {}]
  %s1 = inlined_call_operand.hbm [shape: f32[8,128], index: 1, kind: output, shape index: {}]
  %s2 = sld [smem:[#allocation0]]
  $region18: #{tpu_custom_call.1} parent=0
    _
  %s4 = ssub.s32 1, %s2
  %s5 = scalar_select 0, %s4, %s2
  $region1: #{tpu_custom_call.1} parent=0
    #allocation2 [shape = 'u8[4096]{0}', space=vmem, size = 0x1000, scoped, tag = 'input window, operand 0, single buffered']
    #allocation3 [shape = 's32[1]{0}', space=sflag, size = 0x4, scoped, tag = 'scoped memory for tpu_custom_call.1']
    #allocation4 [shape = 's32[1]{0}', space=sflag, size = 0x4, scoped, tag = 'scoped memory for tpu_custom_call.1']
    #allocation5 [shape = 'u8[4096]{0}', space=vmem, size = 0x1000, scoped, tag = 'output window, operand 0, single buffered']
    %6 = vsyncpa [#allocation3], 0
    %7 = vsyncpa [#allocation4], 0
    // Predicated region
    $region2: #{tpu_custom_call.1} parent=1 // pred_check
      _
    $region3: #{tpu_custom_call.1} parent=1 // pred_check_branch
      %9 = sbr.rel (0) target = $region5
    $region4: #{tpu_custom_call.1} parent=1 // pred_region
      %s11 = ssub.s32 128, 128
      %12 = vsyncadd [#allocation3], %s11
      %s14 = sshll.u32 [#allocation2], 4
      %s15 = int_to_ptr.vmem [resolvable:$true] %s14
      %17 = dma.hbm_to_vmem [thread:$0]  %s0, 128, %s15, [#allocation3]
    $region5: #{tpu_custom_call.1} parent=1 // pred_fallthru
      _
    // Predicated region
    $region6: #{tpu_custom_call.1} parent=1 // pred_check
      _
    $region7: #{tpu_custom_call.1} parent=1 // pred_check_branch
      %19 = sbr.rel (0) target = $region9
    $region8: #{tpu_custom_call.1} parent=1 // pred_region
      %20 = dma.done [#allocation3], 128
    $region9: #{tpu_custom_call.1} parent=1 // pred_fallthru
      _
    %v21 = vld [vmem:[#allocation2] sm:$0xff]
    %22 = vrot.lane.b32.xlu0 %v21, 1
    %v23 = vpop.permute.xlu0 %22
    %24 = vst [vmem:[#allocation5] sm:$0xff] %v23
    // Predicated region
    $region10: #{tpu_custom_call.1} parent=1 // pred_check
      _
    $region11: #{tpu_custom_call.1} parent=1 // pred_check_branch
      %26 = sbr.rel (0) target = $region13
    $region12: #{tpu_custom_call.1} parent=1 // pred_region
      %s28 = ssub.s32 128, 128
      %29 = vsyncadd [#allocation4], %s28
      %s31 = sshll.u32 [#allocation5], 4
      %s32 = int_to_ptr.vmem [resolvable:$true] %s31
      %34 = dma.vmem_to_hbm [thread:$0]  %s32, 128, %s1, [#allocation4]
    $region13: #{tpu_custom_call.1} parent=1 // pred_fallthru
      _
    // Predicated region
    $region14: #{tpu_custom_call.1} parent=1 // pred_check
      _
    $region15: #{tpu_custom_call.1} parent=1 // pred_check_branch
      %36 = sbr.rel (0) target = $region17
    $region16: #{tpu_custom_call.1} parent=1 // pred_region
      %37 = dma.done [#allocation4], 128
    $region17: #{tpu_custom_call.1} parent=1 // pred_fallthru
      _
    %38 = vsyncpa [#allocation3], 1
    %39 = vsyncpa [#allocation4], 1

</llo_original>
